<compile_context>
chip_gen: v7x
topology: tpu7x:2x2x1
jax: 0.10.0
libtpu: 0.0.40
codegen_flags: <defaults>
</compile_context>

<pallas_src>
import jax
import jax.numpy as jnp
from jax import lax
from jax.experimental import pallas as pl
from jax.experimental.pallas import tpu as pltpu


def mlp_kernel(x_ref, w1_ref, b1_ref, w2_ref, b2_ref,
               w3_ref, b3_ref, w4_ref, b4_ref, o_ref):
    # Hidden layers keep batch on the sublane (M) axis -> tb fills the MXU rows.
    h = jnp.tanh(
        jnp.dot(x_ref[...], w1_ref[...], preferred_element_type=jnp.float32)
        + b1_ref[...])                                             # (tb, 64)
    h = jnp.tanh(
        jnp.dot(h, w2_ref[...], preferred_element_type=jnp.float32)
        + b2_ref[...])                                             # (tb, 32)
    h = jnp.tanh(
        jnp.dot(h, w3_ref[...], preferred_element_type=jnp.float32)
        + b3_ref[...])                                             # (tb, 16)
    # Head with batch moved onto the LANE axis:
    #   (1,16) . (tb,16)^T -> (1, tb)   (same contraction pattern as q @ k^T)
    y = lax.dot_general(w4_ref[...], h, (((1,), (1,)), ((), ())),
                        preferred_element_type=jnp.float32) + b4_ref[...]
    # Lane-dense, unmasked store: replicate the row across the 8 sublanes of the
    # (8, tb) output block; only sublane 0 is read back by the wrapper.
    o_ref[...] = jnp.broadcast_to(y, o_ref.shape)


def _round_up(a, m):
    return ((a + m - 1) // m) * m


def neural_network3_forward(x, params, *, tb=512):
    """x: (B, 17) float32. Returns (B,) float32 — matches PyTorch x[:, 0]."""
    (w1, b1), (w2, b2), (w3, b3), (w4, b4) = params
    B, F = x.shape
    assert F == 17

    # Effective batch tile: the whole 8-rounded batch if it is small, otherwise
    # `tb` rounded to a multiple of 128 (keeps lane stores unmasked and fills
    # MXU rows: 128-granular on v5e, 256-granular on v6e/v7x with tb=512).
    if B <= tb:
        tb_eff = _round_up(B, 8)
    else:
        tb_eff = _round_up(tb, 128)
    num_tiles = pl.cdiv(B, tb_eff)
    b_pad = num_tiles * tb_eff
    if b_pad != B:
        x = jnp.pad(x, ((0, b_pad - B), (0, 0)))   # zero rows: computed, discarded

    w4_row = jnp.transpose(w4)                     # (1, 16) head weights (row form)

    # Full-extent, constant-index blocks for the (tiny) weights & biases.
    def weight_spec(shape):
        return pl.BlockSpec(shape, lambda i: (0, 0))

    n_flops = 2 * b_pad * (17 * 64 + 64 * 32 + 32 * 16 + 16 * 1)
    n_trans = b_pad * (64 + 32 + 16)
    n_weight_bytes = 4 * (17 * 64 + 64 + 64 * 32 + 32 + 32 * 16 + 16 + 16 + 1)
    n_bytes = 4 * b_pad * 17 + 4 * num_tiles * 8 * tb_eff + n_weight_bytes

    out = pl.pallas_call(
        mlp_kernel,
        out_shape=jax.ShapeDtypeStruct((num_tiles, 8, tb_eff), jnp.float32),
        grid_spec=pltpu.PrefetchScalarGridSpec(
            num_scalar_prefetch=0,
            grid=(num_tiles,),
            in_specs=[
                pl.BlockSpec((tb_eff, 17), lambda i: (i, 0)),   # x batch tile
                weight_spec((17, 64)), weight_spec((1, 64)),
                weight_spec((64, 32)), weight_spec((1, 32)),
                weight_spec((32, 16)), weight_spec((1, 16)),
                weight_spec((1, 16)),  weight_spec((1, 1)),
            ],
            out_specs=pl.BlockSpec((None, 8, tb_eff), lambda i: (i, 0, 0)),
        ),
        compiler_params=pltpu.CompilerParams(
            # Batch tiles are independent -> shard across TensorCores (v7x).
            dimension_semantics=("parallel",),
        ),
        cost_estimate=pl.CostEstimate(
            flops=n_flops, transcendentals=n_trans, bytes_accessed=n_bytes),
    )(x, w1, b1, w2, b2, w3, b3, w4_row, b4)

    # Row 0 of each (8, tb) block holds that tile's results, batch on lanes.
    return out[:, 0, :].reshape(-1)[:B]


def init_params(key):
    """Deterministic init matching PyTorch Linear shapes (stored transposed:
    (in, out)); uniform(-1/sqrt(fan_in), 1/sqrt(fan_in)) like nn.Linear."""
    dims = [(17, 64), (64, 32), (32, 16), (16, 1)]
    params = []
    for (fan_in, fan_out) in dims:
        key, kw, kb = jax.random.split(key, 3)
        bound = 1.0 / jnp.sqrt(jnp.float32(fan_in))
        w = jax.random.uniform(kw, (fan_in, fan_out), jnp.float32, -bound, bound)
        b = jax.random.uniform(kb, (1, fan_out), jnp.float32, -bound, bound)
        params.append((w, b))
    return params


def reference_forward(x, params):
    """Pure-JAX reference of the PyTorch module."""
    (w1, b1), (w2, b2), (w3, b3), (w4, b4) = params
    h = jnp.tanh(x @ w1 + b1)
    h = jnp.tanh(h @ w2 + b2)
    h = jnp.tanh(h @ w3 + b3)
    out = h @ w4 + b4
    return out[:, 0]


if __name__ == "__main__":
    key = jax.random.PRNGKey(0)
    key, kx = jax.random.split(key)

    B = 16                      # small demo batch; features fixed at 17 by the module
    x = jax.random.normal(kx, (B, 17), dtype=jnp.float32)
    params = init_params(key)

    y = neural_network3_forward(x, params)
    y = jax.block_until_ready(y)

    y_ref = reference_forward(x, params)
    assert y.shape == (B,)
    assert jnp.allclose(y, y_ref, atol=1e-5, rtol=1e-5)

    print("KERNEL_OK")
</pallas_src>

<mosaic_0001>
module attributes {stable_mosaic.version = 11 : i64} {
  func.func @mlp_kernel(%arg0: i32, %arg1: memref<16x17xf32, #tpu.memory_space<vmem>>, %arg2: memref<17x64xf32, #tpu.memory_space<vmem>>, %arg3: memref<1x64xf32, #tpu.memory_space<vmem>>, %arg4: memref<64x32xf32, #tpu.memory_space<vmem>>, %arg5: memref<1x32xf32, #tpu.memory_space<vmem>>, %arg6: memref<32x16xf32, #tpu.memory_space<vmem>>, %arg7: memref<1x16xf32, #tpu.memory_space<vmem>>, %arg8: memref<1x16xf32, #tpu.memory_space<vmem>>, %arg9: memref<1x1xf32, #tpu.memory_space<vmem>>, %arg10: memref<1x8x16xf32, #tpu.memory_space<vmem>>) attributes {dimension_semantics = [#tpu.dimension_semantics<parallel>], iteration_bounds = array<i64: 1>, scalar_prefetch = 0 : i64, scratch_operands = 0 : i64, tpu.core_type = #tpu.core_type<tc>, window_params = [{transform_indices = @transform_0, window_bounds = array<i64: 16, 17>}, {pipeline_mode = #tpu.pipeline_mode<synchronous>, transform_indices = @transform_1, window_bounds = array<i64: 17, 64>}, {pipeline_mode = #tpu.pipeline_mode<synchronous>, transform_indices = @transform_2, window_bounds = array<i64: 1, 64>}, {pipeline_mode = #tpu.pipeline_mode<synchronous>, transform_indices = @transform_3, window_bounds = array<i64: 64, 32>}, {pipeline_mode = #tpu.pipeline_mode<synchronous>, transform_indices = @transform_4, window_bounds = array<i64: 1, 32>}, {pipeline_mode = #tpu.pipeline_mode<synchronous>, transform_indices = @transform_5, window_bounds = array<i64: 32, 16>}, {pipeline_mode = #tpu.pipeline_mode<synchronous>, transform_indices = @transform_6, window_bounds = array<i64: 1, 16>}, {pipeline_mode = #tpu.pipeline_mode<synchronous>, transform_indices = @transform_7, window_bounds = array<i64: 1, 16>}, {pipeline_mode = #tpu.pipeline_mode<synchronous>, transform_indices = @transform_8, window_bounds = array<i64: 1, 1>}, {transform_indices = @transform_9, window_bounds = array<i64: 1, 8, 16>}]} {
    %c0 = arith.constant 0 : index
    %c0_0 = arith.constant 0 : index
    %0 = vector.load %arg1[%c0, %c0_0] : memref<16x17xf32, #tpu.memory_space<vmem>>, vector<16x17xf32>
    %c0_1 = arith.constant 0 : index
    %c0_2 = arith.constant 0 : index
    %1 = vector.load %arg2[%c0_1, %c0_2] : memref<17x64xf32, #tpu.memory_space<vmem>>, vector<17x64xf32>
    %cst = arith.constant dense<0.000000e+00> : vector<16x64xf32>
    %2 = tpu.matmul %0, %1, %cst {dimension_numbers = #tpu.dot_dimension_numbers<[1], [0], [0], [1], [0, 0, 1, 1], [], []>} : vector<16x17xf32>, vector<17x64xf32>, vector<16x64xf32> -> vector<16x64xf32>
    %c0_3 = arith.constant 0 : index
    %c0_4 = arith.constant 0 : index
    %3 = vector.load %arg3[%c0_3, %c0_4] : memref<1x64xf32, #tpu.memory_space<vmem>>, vector<1x64xf32>
    %4 = vector.broadcast %3 : vector<1x64xf32> to vector<16x64xf32>
    %5 = arith.addf %2, %4 : vector<16x64xf32>
    %6 = math.tanh %5 : vector<16x64xf32>
    %c0_5 = arith.constant 0 : index
    %c0_6 = arith.constant 0 : index
    %7 = vector.load %arg4[%c0_5, %c0_6] : memref<64x32xf32, #tpu.memory_space<vmem>>, vector<64x32xf32>
    %cst_7 = arith.constant dense<0.000000e+00> : vector<16x32xf32>
    %8 = tpu.matmul %6, %7, %cst_7 {dimension_numbers = #tpu.dot_dimension_numbers<[1], [0], [0], [1], [0, 0, 1, 1], [], []>} : vector<16x64xf32>, vector<64x32xf32>, vector<16x32xf32> -> vector<16x32xf32>
    %c0_8 = arith.constant 0 : index
    %c0_9 = arith.constant 0 : index
    %9 = vector.load %arg5[%c0_8, %c0_9] : memref<1x32xf32, #tpu.memory_space<vmem>>, vector<1x32xf32>
    %10 = vector.broadcast %9 : vector<1x32xf32> to vector<16x32xf32>
    %11 = arith.addf %8, %10 : vector<16x32xf32>
    %12 = math.tanh %11 : vector<16x32xf32>
    %c0_10 = arith.constant 0 : index
    %c0_11 = arith.constant 0 : index
    %13 = vector.load %arg6[%c0_10, %c0_11] : memref<32x16xf32, #tpu.memory_space<vmem>>, vector<32x16xf32>
    %cst_12 = arith.constant dense<0.000000e+00> : vector<16x16xf32>
    %14 = tpu.matmul %12, %13, %cst_12 {dimension_numbers = #tpu.dot_dimension_numbers<[1], [0], [0], [1], [0, 0, 1, 1], [], []>} : vector<16x32xf32>, vector<32x16xf32>, vector<16x16xf32> -> vector<16x16xf32>
    %c0_13 = arith.constant 0 : index
    %c0_14 = arith.constant 0 : index
    %15 = vector.load %arg7[%c0_13, %c0_14] : memref<1x16xf32, #tpu.memory_space<vmem>>, vector<1x16xf32>
    %16 = vector.broadcast %15 : vector<1x16xf32> to vector<16x16xf32>
    %17 = arith.addf %14, %16 : vector<16x16xf32>
    %18 = math.tanh %17 : vector<16x16xf32>
    %c0_15 = arith.constant 0 : index
    %c0_16 = arith.constant 0 : index
    %19 = vector.load %arg8[%c0_15, %c0_16] : memref<1x16xf32, #tpu.memory_space<vmem>>, vector<1x16xf32>
    %cst_17 = arith.constant dense<0.000000e+00> : vector<1x16xf32>
    %20 = tpu.matmul %19, %18, %cst_17 {dimension_numbers = #tpu.dot_dimension_numbers<[1], [1], [0], [0], [0, 0, 1, 0], [], []>} : vector<1x16xf32>, vector<16x16xf32>, vector<1x16xf32> -> vector<1x16xf32>
    %c0_18 = arith.constant 0 : index
    %c0_19 = arith.constant 0 : index
    %21 = vector.load %arg9[%c0_18, %c0_19] : memref<1x1xf32, #tpu.memory_space<vmem>>, vector<1x1xf32>
    %22 = vector.broadcast %21 : vector<1x1xf32> to vector<1x16xf32>
    %23 = arith.addf %20, %22 : vector<1x16xf32>
    %24 = vector.shape_cast %23 : vector<1x16xf32> to vector<1x16xf32>
    %25 = vector.broadcast %24 : vector<1x16xf32> to vector<8x16xf32>
    %c0_20 = arith.constant 0 : index
    %c0_21 = arith.constant 0 : index
    %c0_22 = arith.constant 0 : index
    %26 = vector.load %arg10[%c0_20, %c0_21, %c0_22] : memref<1x8x16xf32, #tpu.memory_space<vmem>>, vector<1x8x16xf32>
    %27 = vector.shape_cast %26 : vector<1x8x16xf32> to vector<8x16xf32>
    %28 = vector.shape_cast %25 : vector<8x16xf32> to vector<1x8x16xf32>
    tpu.vector_store %arg10[%c0_20, %c0_21, %c0_22], %28 {strides = array<i32>} : memref<1x8x16xf32, #tpu.memory_space<vmem>>, vector<1x8x16xf32>,
    return
  }
  func.func @transform_0(%arg0: i32) -> (i32, i32) {
    %c0_i32 = arith.constant 0 : i32
    %c0_i32_0 = arith.constant 0 : i32
    return %arg0, %c0_i32 : i32, i32
  }
  func.func @transform_1(%arg0: i32) -> (i32, i32) {
    %c0_i32 = arith.constant 0 : i32
    %c0_i32_0 = arith.constant 0 : i32
    %c0_i32_1 = arith.constant 0 : i32
    return %c0_i32, %c0_i32_0 : i32, i32
  }
  func.func @transform_2(%arg0: i32) -> (i32, i32) {
    %c0_i32 = arith.constant 0 : i32
    %c0_i32_0 = arith.constant 0 : i32
    %c0_i32_1 = arith.constant 0 : i32
    return %c0_i32, %c0_i32_0 : i32, i32
  }
  func.func @transform_3(%arg0: i32) -> (i32, i32) {
    %c0_i32 = arith.constant 0 : i32
    %c0_i32_0 = arith.constant 0 : i32
    %c0_i32_1 = arith.constant 0 : i32
    return %c0_i32, %c0_i32_0 : i32, i32
  }
  func.func @transform_4(%arg0: i32) -> (i32, i32) {
    %c0_i32 = arith.constant 0 : i32
    %c0_i32_0 = arith.constant 0 : i32
    %c0_i32_1 = arith.constant 0 : i32
    return %c0_i32, %c0_i32_0 : i32, i32
  }
  func.func @transform_5(%arg0: i32) -> (i32, i32) {
    %c0_i32 = arith.constant 0 : i32
    %c0_i32_0 = arith.constant 0 : i32
    %c0_i32_1 = arith.constant 0 : i32
    return %c0_i32, %c0_i32_0 : i32, i32
  }
  func.func @transform_6(%arg0: i32) -> (i32, i32) {
    %c0_i32 = arith.constant 0 : i32
    %c0_i32_0 = arith.constant 0 : i32
    %c0_i32_1 = arith.constant 0 : i32
    return %c0_i32, %c0_i32_0 : i32, i32
  }
  func.func @transform_7(%arg0: i32) -> (i32, i32) {
    %c0_i32 = arith.constant 0 : i32
    %c0_i32_0 = arith.constant 0 : i32
    %c0_i32_1 = arith.constant 0 : i32
    return %c0_i32, %c0_i32_0 : i32, i32
  }
  func.func @transform_8(%arg0: i32) -> (i32, i32) {
    %c0_i32 = arith.constant 0 : i32
    %c0_i32_0 = arith.constant 0 : i32
    %c0_i32_1 = arith.constant 0 : i32
    return %c0_i32, %c0_i32_0 : i32, i32
  }
  func.func @transform_9(%arg0: i32) -> (i32, i32, i32) {
    %c0_i32 = arith.constant 0 : i32
    %c0_i32_0 = arith.constant 0 : i32
    %c0_i32_1 = arith.constant 0 : i32
    return %arg0, %c0_i32, %c0_i32_0 : i32, i32, i32
  }
}

</mosaic_0001>

<llo_original>
// kernel: tpu_custom_call.1
$region0: #{tpu_custom_call.1}
  #allocation0 [shape = 'u32[]', space=smem, size = 0x4, offset = 0x4, fixed_abs, tag = 'smem constant byte address 0x4 - core index']
  #allocation1 [shape = 'u32[144,128]{1,0:T(1,128)}', space=vmem, size = 0x12000, scoped, tag = 'internal scratch']
  #allocation2 [shape = 'f32[1,1]{1,0:T(1,128)S(1)}', space=vmem, size = 0x200, scoped, tag = 'scoped memory for tpu_custom_call.1']
  %s0 = inlined_call_operand.vmem [shape: f32[16,17], index: 0, kind: input, shape index: {}]
  %s1 = inlined_call_operand.vmem [shape: f32[17,64], index: 1, kind: input, shape index: {}]
  %s2 = inlined_call_operand.vmem [shape: f32[1,64], index: 2, kind: input, shape index: {}]
  %s3 = inlined_call_operand.vmem [shape: f32[64,32], index: 3, kind: input, shape index: {}]
  %s4 = inlined_call_operand.vmem [shape: f32[1,32], index: 4, kind: input, shape index: {}]
  %s5 = inlined_call_operand.vmem [shape: f32[32,16], index: 5, kind: input, shape index: {}]
  %s6 = inlined_call_operand.vmem [shape: f32[1,16], index: 6, kind: input, shape index: {}]
  %s7 = inlined_call_operand.vmem [shape: f32[1,16], index: 7, kind: input, shape index: {}]
  %s8 = inlined_call_operand.<no memory space> [shape: f32[1,1], index: 8, kind: input, shape index: {}]
  %s9 = inlined_call_operand.hbm [shape: f32[1,8,16], index: 9, kind: output, shape index: {}]
  %s10 = sld [smem:[#allocation0]]
  $region46: #{tpu_custom_call.1} parent=0
    _
  %s12 = ssub.s32 1, %s10
  %s13 = scalar_select 0, %s12, %s10
  %v14 = vstv %s8
  %15 = vst [vmem:[#allocation2] sm:$0x1] %v14
  $region1: #{tpu_custom_call.1} parent=0
    #allocation3 [shape = 'u8[4096]{0}', space=vmem, size = 0x1000, scoped, tag = 'output window, operand 0, single buffered']
    #allocation4 [shape = 's32[1]{0}', space=sflag, size = 0x4, scoped, tag = 'scoped memory for tpu_custom_call.1']
    %16 = vsyncpa [#allocation4], 0
    // Predicated region
    $region2: #{tpu_custom_call.1} parent=1 // pred_check
      _
    $region3: #{tpu_custom_call.1} parent=1 // pred_check_branch
      %18 = sbr.rel (0) target = $region5
    $region4: #{tpu_custom_call.1} parent=1 // pred_region
      _
    $region5: #{tpu_custom_call.1} parent=1 // pred_fallthru
      _
    // Predicated region
    $region6: #{tpu_custom_call.1} parent=1 // pred_check
      _
    $region7: #{tpu_custom_call.1} parent=1 // pred_check_branch
      %20 = sbr.rel (0) target = $region9
    $region8: #{tpu_custom_call.1} parent=1 // pred_region
      _
    $region9: #{tpu_custom_call.1} parent=1 // pred_fallthru
      _
    // Predicated region
    $region10: #{tpu_custom_call.1} parent=1 // pred_check
      _
    $region11: #{tpu_custom_call.1} parent=1 // pred_check_branch
      %22 = sbr.rel (0) target = $region13
    $region12: #{tpu_custom_call.1} parent=1 // pred_region
      _
    $region13: #{tpu_custom_call.1} parent=1 // pred_fallthru
      _
    // Predicated region
    $region14: #{tpu_custom_call.1} parent=1 // pred_check
      _
    $region15: #{tpu_custom_call.1} parent=1 // pred_check_branch
      %24 = sbr.rel (0) target = $region17
    $region16: #{tpu_custom_call.1} parent=1 // pred_region
      _
    $region17: #{tpu_custom_call.1} parent=1 // pred_fallthru
      _
    // Predicated region
    $region18: #{tpu_custom_call.1} parent=1 // pred_check
      _
    $region19: #{tpu_custom_call.1} parent=1 // pred_check_branch
      %26 = sbr.rel (0) target = $region21
    $region20: #{tpu_custom_call.1} parent=1 // pred_region
      _
    $region21: #{tpu_custom_call.1} parent=1 // pred_fallthru
      _
    // Predicated region
    $region22: #{tpu_custom_call.1} parent=1 // pred_check
      _
    $region23: #{tpu_custom_call.1} parent=1 // pred_check_branch
      %28 = sbr.rel (0) target = $region25
    $region24: #{tpu_custom_call.1} parent=1 // pred_region
      _
    $region25: #{tpu_custom_call.1} parent=1 // pred_fallthru
      _
    // Predicated region
    $region26: #{tpu_custom_call.1} parent=1 // pred_check
      _
    $region27: #{tpu_custom_call.1} parent=1 // pred_check_branch
      %30 = sbr.rel (0) target = $region29
    $region28: #{tpu_custom_call.1} parent=1 // pred_region
      _
    $region29: #{tpu_custom_call.1} parent=1 // pred_fallthru
      _
    // Predicated region
    $region30: #{tpu_custom_call.1} parent=1 // pred_check
      _
    $region31: #{tpu_custom_call.1} parent=1 // pred_check_branch
      %32 = sbr.rel (0) target = $region33
    $region32: #{tpu_custom_call.1} parent=1 // pred_region
      _
    $region33: #{tpu_custom_call.1} parent=1 // pred_fallthru
      _
    // Predicated region
    $region34: #{tpu_custom_call.1} parent=1 // pred_check
      _
    $region35: #{tpu_custom_call.1} parent=1 // pred_check_branch
      %34 = sbr.rel (0) target = $region37
    $region36: #{tpu_custom_call.1} parent=1 // pred_region
      _
    $region37: #{tpu_custom_call.1} parent=1 // pred_fallthru
      _
    %v35 = vld [vmem:[%s0] sm:$0xff]
    %v36 = vld [vmem:[%s0 + $0x8] sm:$0xff]
    %v37 = vld [vmem:[%s1] sm:$0xff]
    %v38 = vld [vmem:[%s1 + $0x8] sm:$0xff]
    %v39 = vld [vmem:[%s1 + $0x10] sm:$0x1]
    %v40 = vld [vmem:[%s2] sm:$0x1]
    %v42 = vlaneseq
    %v43 = vshrl.u32 %v42, 7
    %v44 = vsub.s32 0, %v43
    %v45 = vrot.slane %v40, %v44
    %vm47 = vcmask 138240
    %v49 = vsel %vm47, %v35, 0
    %v52 = vsel %vm47, %v36, 0
    %vm54 = vcmask 1040384
    %v56 = vsel %vm54, %v39, 0
    %58 = vmatprep.subr.mxu0 0.0
    %59 = vmatpush1.msra.mxu0 %v37
    %60 = vmatprep.subr.mxu0 0.0
    %61 = vmatpush1.msra.mxu0 %v38
    %62 = vmatprep.subr.mxu0 0.0
    %63 = vmatpush1.msra.mxu0 %v56
    %64 = vmatprep.subr.mxu0 0.0
    %65 = vmatpush1.msra.mxu0 0.0
    %66 = vmatprep.subr.mxu0 0.0
    %67 = vmatpush1.msra.mxu0 0.0
    %68 = vmatprep.subr.mxu0 0.0
    %69 = vmatpush1.msra.mxu0 0.0
    %70 = vmatprep.subr.mxu0 0.0
    %71 = vmatpush1.msra.mxu0 0.0
    %72 = vmatprep.subr.mxu0 0.0
    %73 = vmatpush1.msra.mxu0 0.0
    %74 = vmatprep.subr.mxu0 0.0
    %75 = vmatpush1.msra.mxu0 0.0
    %76 = vmatprep.subr.mxu0 0.0
    %77 = vmatpush1.msra.mxu0 0.0
    %78 = vmatprep.subr.mxu0 0.0
    %79 = vmatpush1.msra.mxu0 0.0
    %80 = vmatprep.subr.mxu0 0.0
    %81 = vmatpush1.msra.mxu0 0.0
    %82 = vmatprep.subr.mxu0 0.0
    %83 = vmatpush1.msra.mxu0 0.0
    %84 = vmatprep.subr.mxu0 0.0
    %85 = vmatpush1.msra.mxu0 0.0
    %86 = vmatprep.subr.mxu0 0.0
    %87 = vmatpush1.msra.mxu0 0.0
    %88 = vmatprep.subr.mxu0 0.0
    %89 = vmatpush1.msra.mxu0 0.0
    %90 = vmatprep.subr.mxu0 0.0
    %91 = vmatpush1.msra.mxu0 0.0
    %92 = vmatprep.subr.mxu0 0.0
    %93 = vmatpush1.msra.mxu0 0.0
    %94 = vmatprep.subr.mxu0 0.0
    %95 = vmatpush1.msra.mxu0 0.0
    %96 = vmatprep.subr.mxu0 0.0
    %97 = vmatpush1.msra.mxu0 0.0
    %98 = vmatprep.subr.mxu0 0.0
    %99 = vmatpush1.msra.mxu0 0.0
    %100 = vmatprep.subr.mxu0 0.0
    %101 = vmatpush1.msra.mxu0 0.0
    %102 = vmatprep.subr.mxu0 0.0
    %103 = vmatpush1.msra.mxu0 0.0
    %104 = vmatprep.subr.mxu0 0.0
    %105 = vmatpush1.msra.mxu0 0.0
    %106 = vmatprep.subr.mxu0 0.0
    %107 = vmatpush1.msra.mxu0 0.0
    %108 = vmatprep.subr.mxu0 0.0
    %109 = vmatpush1.msra.mxu0 0.0
    %110 = vmatprep.subr.mxu0 0.0
    %111 = vmatpush1.msra.mxu0 0.0
    %112 = vmatprep.subr.mxu0 0.0
    %113 = vmatpush1.msra.mxu0 0.0
    %114 = vmatprep.subr.mxu0 0.0
    %115 = vmatpush1.msra.mxu0 0.0
    %116 = vmatprep.subr.mxu0 0.0
    %117 = vmatpush1.msra.mxu0 0.0
    %118 = vmatprep.subr.mxu0 0.0
    %119 = vmatpush1.msra.mxu0 0.0
    %120 = vmatprep.subr.mxu0 0.0
    %121 = vmatpush1.msra.mxu0 0.0
    %122 = vmatprep.mubr.f32.mxu0 0.0
    %123 = vmatmul.mubr.f32.gmra.mrb[0].mxu0 %v49
    %v124 = vpop.f32.mrb[0].mxu0
    %v125 = vadd.f32 %v45, %v124
    %v126 = vpop.f32.mrb[0].mxu0
    %127 = vmatprep.mubr.f32.mxu0 0.0
    %128 = vmatmul.mubr.f32.gmra.mrb[0].mxu0 %v52
    %v129 = vpop.f32.mrb[0].mxu0
    %v130 = vadd.f32 %v45, %v129
    %v131 = vpop.f32.mrb[0].mxu0
    %132 = vdwg.mxu0
    %v133 = vtanh.pop %v125
    %v134 = vtanh.pop %v130
    %v135 = vld [vmem:[%s3] sm:$0xff]
    %v136 = vld [vmem:[%s3 + $0x8] sm:$0xff]
    %v137 = vld [vmem:[%s3 + $0x10] sm:$0xff]
    %v138 = vld [vmem:[%s3 + $0x18] sm:$0xff]
    %v139 = vld [vmem:[%s3 + $0x20] sm:$0xff]
    %v140 = vld [vmem:[%s3 + $0x28] sm:$0xff]
    %v141 = vld [vmem:[%s3 + $0x30] sm:$0xff]
    %v142 = vld [vmem:[%s3 + $0x38] sm:$0xff]
    %v143 = vld [vmem:[%s4] sm:$0x1]
    %v145 = vlaneseq
    %v146 = vshrl.u32 %v145, 7
    %v147 = vsub.s32 0, %v146
    %v148 = vrot.slane %v143, %v147
    %vm150 = vcmask 523264
    %v152 = vsel %vm150, %v133, 0
    %v155 = vsel %vm150, %v134, 0
    %157 = vmatprep.subr.mxu0 0.0
    %158 = vmatpush1.msra.mxu0 %v135
    %159 = vmatprep.subr.mxu0 0.0
    %160 = vmatpush1.msra.mxu0 %v136
    %161 = vmatprep.subr.mxu0 0.0
    %162 = vmatpush1.msra.mxu0 %v137
    %163 = vmatprep.subr.mxu0 0.0
    %164 = vmatpush1.msra.mxu0 %v138
    %165 = vmatprep.subr.mxu0 0.0
    %166 = vmatpush1.msra.mxu0 %v139
    %167 = vmatprep.subr.mxu0 0.0
    %168 = vmatpush1.msra.mxu0 %v140
    %169 = vmatprep.subr.mxu0 0.0
    %170 = vmatpush1.msra.mxu0 %v141
    %171 = vmatprep.subr.mxu0 0.0
    %172 = vmatpush1.msra.mxu0 %v142
    %173 = vmatprep.subr.mxu0 0.0
    %174 = vmatpush1.msra.mxu0 0.0
    %175 = vmatprep.subr.mxu0 0.0
    %176 = vmatpush1.msra.mxu0 0.0
    %177 = vmatprep.subr.mxu0 0.0
    %178 = vmatpush1.msra.mxu0 0.0
    %179 = vmatprep.subr.mxu0 0.0
    %180 = vmatpush1.msra.mxu0 0.0
    %181 = vmatprep.subr.mxu0 0.0
    %182 = vmatpush1.msra.mxu0 0.0
    %183 = vmatprep.subr.mxu0 0.0
    %184 = vmatpush1.msra.mxu0 0.0
    %185 = vmatprep.subr.mxu0 0.0
    %186 = vmatpush1.msra.mxu0 0.0
    %187 = vmatprep.subr.mxu0 0.0
    %188 = vmatpush1.msra.mxu0 0.0
    %189 = vmatprep.subr.mxu0 0.0
    %190 = vmatpush1.msra.mxu0 0.0
    %191 = vmatprep.subr.mxu0 0.0
    %192 = vmatpush1.msra.mxu0 0.0
    %193 = vmatprep.subr.mxu0 0.0
    %194 = vmatpush1.msra.mxu0 0.0
    %195 = vmatprep.subr.mxu0 0.0
    %196 = vmatpush1.msra.mxu0 0.0
    %197 = vmatprep.subr.mxu0 0.0
    %198 = vmatpush1.msra.mxu0 0.0
    %199 = vmatprep.subr.mxu0 0.0
    %200 = vmatpush1.msra.mxu0 0.0
    %201 = vmatprep.subr.mxu0 0.0
    %202 = vmatpush1.msra.mxu0 0.0
    %203 = vmatprep.subr.mxu0 0.0
    %204 = vmatpush1.msra.mxu0 0.0
    %205 = vmatprep.subr.mxu0 0.0
    %206 = vmatpush1.msra.mxu0 0.0
    %207 = vmatprep.subr.mxu0 0.0
    %208 = vmatpush1.msra.mxu0 0.0
    %209 = vmatprep.subr.mxu0 0.0
    %210 = vmatpush1.msra.mxu0 0.0
    %211 = vmatprep.subr.mxu0 0.0
    %212 = vmatpush1.msra.mxu0 0.0
    %213 = vmatprep.subr.mxu0 0.0
    %214 = vmatpush1.msra.mxu0 0.0
    %215 = vmatprep.subr.mxu0 0.0
    %216 = vmatpush1.msra.mxu0 0.0
    %217 = vmatprep.subr.mxu0 0.0
    %218 = vmatpush1.msra.mxu0 0.0
    %219 = vmatprep.subr.mxu0 0.0
    %220 = vmatpush1.msra.mxu0 0.0
    %221 = vmatprep.mubr.f32.mxu0 0.0
    %222 = vmatmul.mubr.f32.gmra.mrb[0].mxu0 %v152
    %v223 = vpop.f32.mrb[0].mxu0
    %v224 = vadd.f32 %v148, %v223
    %v225 = vpop.f32.mrb[0].mxu0
    %226 = vmatprep.mubr.f32.mxu0 0.0
    %227 = vmatmul.mubr.f32.gmra.mrb[0].mxu0 %v155
    %v228 = vpop.f32.mrb[0].mxu0
    %v229 = vadd.f32 %v148, %v228
    %v230 = vpop.f32.mrb[0].mxu0
    %231 = vdwg.mxu0
    %v232 = vtanh.pop %v224
    %v233 = vtanh.pop %v229
    %v234 = vld [vmem:[%s5] sm:$0xff]
    %v235 = vld [vmem:[%s5 + $0x8] sm:$0xff]
    %v236 = vld [vmem:[%s5 + $0x10] sm:$0xff]
    %v237 = vld [vmem:[%s5 + $0x18] sm:$0xff]
    %v238 = vld [vmem:[%s6] sm:$0x1]
    %v240 = vlaneseq
    %v241 = vshrl.u32 %v240, 7
    %v242 = vsub.s32 0, %v241
    %v243 = vrot.slane %v238, %v242
    %vm245 = vcmask 261120
    %v247 = vsel %vm245, %v232, 0
    %v250 = vsel %vm245, %v233, 0
    %252 = vmatprep.subr.mxu0 0.0
    %253 = vmatpush1.msra.mxu0 %v234
    %254 = vmatprep.subr.mxu0 0.0
    %255 = vmatpush1.msra.mxu0 %v235
    %256 = vmatprep.subr.mxu0 0.0
    %257 = vmatpush1.msra.mxu0 %v236
    %258 = vmatprep.subr.mxu0 0.0
    %259 = vmatpush1.msra.mxu0 %v237
    %260 = vmatprep.subr.mxu0 0.0
    %261 = vmatpush1.msra.mxu0 0.0
    %262 = vmatprep.subr.mxu0 0.0
    %263 = vmatpush1.msra.mxu0 0.0
    %264 = vmatprep.subr.mxu0 0.0
    %265 = vmatpush1.msra.mxu0 0.0
    %266 = vmatprep.subr.mxu0 0.0
    %267 = vmatpush1.msra.mxu0 0.0
    %268 = vmatprep.subr.mxu0 0.0
    %269 = vmatpush1.msra.mxu0 0.0
    %270 = vmatprep.subr.mxu0 0.0
    %271 = vmatpush1.msra.mxu0 0.0
    %272 = vmatprep.subr.mxu0 0.0
    %273 = vmatpush1.msra.mxu0 0.0
    %274 = vmatprep.subr.mxu0 0.0
    %275 = vmatpush1.msra.mxu0 0.0
    %276 = vmatprep.subr.mxu0 0.0
    %277 = vmatpush1.msra.mxu0 0.0
    %278 = vmatprep.subr.mxu0 0.0
    %279 = vmatpush1.msra.mxu0 0.0
    %280 = vmatprep.subr.mxu0 0.0
    %281 = vmatpush1.msra.mxu0 0.0
    %282 = vmatprep.subr.mxu0 0.0
    %283 = vmatpush1.msra.mxu0 0.0
    %284 = vmatprep.subr.mxu0 0.0
    %285 = vmatpush1.msra.mxu0 0.0
    %286 = vmatprep.subr.mxu0 0.0
    %287 = vmatpush1.msra.mxu0 0.0
    %288 = vmatprep.subr.mxu0 0.0
    %289 = vmatpush1.msra.mxu0 0.0
    %290 = vmatprep.subr.mxu0 0.0
    %291 = vmatpush1.msra.mxu0 0.0
    %292 = vmatprep.subr.mxu0 0.0
    %293 = vmatpush1.msra.mxu0 0.0
    %294 = vmatprep.subr.mxu0 0.0
    %295 = vmatpush1.msra.mxu0 0.0
    %296 = vmatprep.subr.mxu0 0.0
    %297 = vmatpush1.msra.mxu0 0.0
    %298 = vmatprep.subr.mxu0 0.0
    %299 = vmatpush1.msra.mxu0 0.0
    %300 = vmatprep.subr.mxu0 0.0
    %301 = vmatpush1.msra.mxu0 0.0
    %302 = vmatprep.subr.mxu0 0.0
    %303 = vmatpush1.msra.mxu0 0.0
    %304 = vmatprep.subr.mxu0 0.0
    %305 = vmatpush1.msra.mxu0 0.0
    %306 = vmatprep.subr.mxu0 0.0
    %307 = vmatpush1.msra.mxu0 0.0
    %308 = vmatprep.subr.mxu0 0.0
    %309 = vmatpush1.msra.mxu0 0.0
    %310 = vmatprep.subr.mxu0 0.0
    %311 = vmatpush1.msra.mxu0 0.0
    %312 = vmatprep.subr.mxu0 0.0
    %313 = vmatpush1.msra.mxu0 0.0
    %314 = vmatprep.subr.mxu0 0.0
    %315 = vmatpush1.msra.mxu0 0.0
    %316 = vmatprep.mubr.f32.mxu0 0.0
    %317 = vmatmul.mubr.f32.gmra.mrb[0].mxu0 %v247
    %v318 = vpop.f32.mrb[0].mxu0
    %v319 = vadd.f32 %v243, %v318
    %v320 = vpop.f32.mrb[0].mxu0
    %321 = vmatprep.mubr.f32.mxu0 0.0
    %322 = vmatmul.mubr.f32.gmra.mrb[0].mxu0 %v250
    %v323 = vpop.f32.mrb[0].mxu0
    %v324 = vadd.f32 %v243, %v323
    %v325 = vpop.f32.mrb[0].mxu0
    %326 = vdwg.mxu0
    %v327 = vtanh.pop %v319
    %v328 = vtanh.pop %v324
    %v329 = vld [vmem:[%s7] sm:$0x1]
    %v330 = vld [vmem:[#allocation2] sm:$0x1]
    %332 = vset.pattern.permute.xlu0 0
    %333 = vperm.xlu0 %332, %v330
    %v334 = vpop.permute.xlu0 %333
    %v336 = vlaneseq
    %v337 = vshrl.u32 %v336, 7
    %v338 = vsub.s32 0, %v337
    %v339 = vrot.slane %v334, %v338
    %vm340 = vcmask 130048
    %v342 = vsel %vm340, %v329, 0
    %v345 = vsel %vm340, %v327, 0
    %v348 = vsel %vm340, %v328, 0
    %350 = vmatprep.subr.mxu0 0.0
    %351 = vmatpush1.xpose.msra.mxu0 %v345
    %352 = vmatprep.subr.mxu0 0.0
    %353 = vmatpush1.xpose.msra.mxu0 %v348
    %354 = vmatprep.subr.mxu0 0.0
    %355 = vmatpush1.xpose.msra.mxu0 0.0
    %356 = vmatprep.subr.mxu0 0.0
    %357 = vmatpush1.xpose.msra.mxu0 0.0
    %358 = vmatprep.subr.mxu0 0.0
    %359 = vmatpush1.xpose.msra.mxu0 0.0
    %360 = vmatprep.subr.mxu0 0.0
    %361 = vmatpush1.xpose.msra.mxu0 0.0
    %362 = vmatprep.subr.mxu0 0.0
    %363 = vmatpush1.xpose.msra.mxu0 0.0
    %364 = vmatprep.subr.mxu0 0.0
    %365 = vmatpush1.xpose.msra.mxu0 0.0
    %366 = vmatprep.subr.mxu0 0.0
    %367 = vmatpush1.xpose.msra.mxu0 0.0
    %368 = vmatprep.subr.mxu0 0.0
    %369 = vmatpush1.xpose.msra.mxu0 0.0
    %370 = vmatprep.subr.mxu0 0.0
    %371 = vmatpush1.xpose.msra.mxu0 0.0
    %372 = vmatprep.subr.mxu0 0.0
    %373 = vmatpush1.xpose.msra.mxu0 0.0
    %374 = vmatprep.subr.mxu0 0.0
    %375 = vmatpush1.xpose.msra.mxu0 0.0
    %376 = vmatprep.subr.mxu0 0.0
    %377 = vmatpush1.xpose.msra.mxu0 0.0
    %378 = vmatprep.subr.mxu0 0.0
    %379 = vmatpush1.xpose.msra.mxu0 0.0
    %380 = vmatprep.subr.mxu0 0.0
    %381 = vmatpush1.xpose.msra.mxu0 0.0
    %382 = vmatprep.subr.mxu0 0.0
    %383 = vmatpush1.xpose.msra.mxu0 0.0
    %384 = vmatprep.subr.mxu0 0.0
    %385 = vmatpush1.xpose.msra.mxu0 0.0
    %386 = vmatprep.subr.mxu0 0.0
    %387 = vmatpush1.xpose.msra.mxu0 0.0
    %388 = vmatprep.subr.mxu0 0.0
    %389 = vmatpush1.xpose.msra.mxu0 0.0
    %390 = vmatprep.subr.mxu0 0.0
    %391 = vmatpush1.xpose.msra.mxu0 0.0
    %392 = vmatprep.subr.mxu0 0.0
    %393 = vmatpush1.xpose.msra.mxu0 0.0
    %394 = vmatprep.subr.mxu0 0.0
    %395 = vmatpush1.xpose.msra.mxu0 0.0
    %396 = vmatprep.subr.mxu0 0.0
    %397 = vmatpush1.xpose.msra.mxu0 0.0
    %398 = vmatprep.subr.mxu0 0.0
    %399 = vmatpush1.xpose.msra.mxu0 0.0
    %400 = vmatprep.subr.mxu0 0.0
    %401 = vmatpush1.xpose.msra.mxu0 0.0
    %402 = vmatprep.subr.mxu0 0.0
    %403 = vmatpush1.xpose.msra.mxu0 0.0
    %404 = vmatprep.subr.mxu0 0.0
    %405 = vmatpush1.xpose.msra.mxu0 0.0
    %406 = vmatprep.subr.mxu0 0.0
    %407 = vmatpush1.xpose.msra.mxu0 0.0
    %408 = vmatprep.subr.mxu0 0.0
    %409 = vmatpush1.xpose.msra.mxu0 0.0
    %410 = vmatprep.subr.mxu0 0.0
    %411 = vmatpush1.xpose.msra.mxu0 0.0
    %412 = vmatprep.subr.mxu0 0.0
    %413 = vmatpush1.xpose.msra.mxu0 0.0
    %414 = vmatprep.mubr.f32.mxu0 0.0
    %415 = vmatmul.mubr.f32.gmra.mrb[0].mxu0 %v342
    %v416 = vpop.f32.mrb[0].mxu0
    %v417 = vadd.f32 %v339, %v416
    %v418 = vpop.f32.mrb[0].mxu0
    %419 = vdwg.mxu0
    %v420 = vlaneseq
    %v421 = vshrl.u32 %v420, 7
    %v422 = vsub.s32 0, %v421
    %v423 = vrot.slane %v417, %v422
    %424 = vst.msk [vmem:[#allocation3] sm:$0xff] %vm340, %v423
    // Predicated region
    $region38: #{tpu_custom_call.1} parent=1 // pred_check
      _
    $region39: #{tpu_custom_call.1} parent=1 // pred_check_branch
      %426 = sbr.rel (0) target = $region41
    $region40: #{tpu_custom_call.1} parent=1 // pred_region
      %s428 = ssub.s32 128, 128
      %429 = vsyncadd [#allocation4], %s428
      %s431 = sshll.u32 [#allocation3], 4
      %s432 = int_to_ptr.vmem [resolvable:$true] %s431
      %434 = dma.vmem_to_hbm [thread:$0]  %s432, 128, %s9, [#allocation4]
    $region41: #{tpu_custom_call.1} parent=1 // pred_fallthru
      _
    // Predicated region
    $region42: #{tpu_custom_call.1} parent=1 // pred_check
      _
    $region43: #{tpu_custom_call.1} parent=1 // pred_check_branch
      %436 = sbr.rel (0) target = $region45
    $region44: #{tpu_custom_call.1} parent=1 // pred_region
      %437 = dma.done [#allocation4], 128
    $region45: #{tpu_custom_call.1} parent=1 // pred_fallthru
      _
    %438 = vsyncpa [#allocation4], 1

</llo_original>
